<compile_context>
chip_gen: v7x
topology: tpu7x:2x2x1
jax: 0.10.0
libtpu: 0.0.40
codegen_flags: <defaults>
</compile_context>

<pallas_src>
import jax
import jax.numpy as jnp
from jax.experimental import pallas as pl
from jax.experimental.pallas import tpu as pltpu

BN_EPS = 1e-5


def _cls_kernel(x_ref, w_ref, b_ref, out_ref):
    # x_ref: (Bn, C, HW)  -- HW on the lane axis (lane-dense loads)
    # w_ref: (C, classes) -- folded conv*BN*linear matrix
    # b_ref: (1, classes) -- folded bias
    # out_ref: (Bn, classes)

    # AdaptiveAvgPool2d(1): mean over spatial (lane-axis reduction, XLU).
    pooled = jnp.mean(x_ref[...], axis=-1)                      # (Bn, C) f32

    # Folded conv + BN + Linear: one tiny matmul + bias.
    logits = jnp.dot(pooled, w_ref[...],
                     preferred_element_type=jnp.float32) + b_ref[...]

    # Softmax over classes (max-subtracted for stability).
    m = jnp.max(logits, axis=-1, keepdims=True)
    e = jnp.exp(logits - m)
    probs = e * pl.reciprocal(jnp.sum(e, axis=-1, keepdims=True), approx=False)

    out_ref[...] = probs.astype(out_ref.dtype)


@jax.jit
def cls_forward(x_nchw, conv_w, bn_gamma, bn_beta, bn_mean, bn_var, lin_w, lin_b):
    """x_nchw: (N, C, H, W). Returns (N, classes) softmax probabilities."""
    N, C, H, W = x_nchw.shape
    D = conv_w.shape[0]            # conv_w: (D, C, 1, 1)  (PyTorch layout)
    classes = lin_w.shape[0]       # lin_w:  (classes, D)  (PyTorch layout)
    HW = H * W

    # Native NCHW -> (N, C, HW): pure reshape, no transpose; HW lands on lanes.
    x = x_nchw.reshape(N, C, HW).astype(jnp.float32)

    # Constant-fold conv(1x1) + eval-mode BN + Linear (exact in eval mode).
    scale = bn_gamma.astype(jnp.float32) / jnp.sqrt(bn_var.astype(jnp.float32) + BN_EPS)  # (D,)
    shift = bn_beta.astype(jnp.float32) - bn_mean.astype(jnp.float32) * scale             # (D,)
    wc = conv_w.reshape(D, C).astype(jnp.float32)            # (D, C)
    wl = lin_w.astype(jnp.float32)                           # (classes, D)
    w_fold = (wc.T * scale[None, :]) @ wl.T                  # (C, classes)
    b_fold = (shift @ wl.T + lin_b.astype(jnp.float32)).reshape(1, classes)

    # Batch several samples per grid step (sublane-denser output, amortized
    # per-step overhead); whole batch in one block when N is small.
    bn = min(N, 8)
    grid = (pl.cdiv(N, bn),)

    out = pl.pallas_call(
        _cls_kernel,
        out_shape=jax.ShapeDtypeStruct((N, classes), jnp.float32),
        grid=grid,
        in_specs=[
            pl.BlockSpec((bn, C, HW), lambda n: (n, 0, 0)),   # batched image tile
            pl.BlockSpec((C, classes), lambda n: (0, 0)),     # folded weight
            pl.BlockSpec((1, classes), lambda n: (0, 0)),     # folded bias
        ],
        out_specs=pl.BlockSpec((bn, classes), lambda n: (n, 0)),
        compiler_params=pltpu.CompilerParams(
            dimension_semantics=("parallel",)),
    )(x, w_fold, b_fold)
    return out


def _reference(x_nchw, conv_w, bn_gamma, bn_beta, bn_mean, bn_var, lin_w, lin_b):
    """Pure-JAX reference of the PyTorch eval-mode forward (per-pixel order)."""
    N, C, H, W = x_nchw.shape
    D = conv_w.shape[0]
    y = jnp.einsum('nchw,dc->ndhw', x_nchw, conv_w.reshape(D, C))
    y = (y - bn_mean[None, :, None, None]) / jnp.sqrt(bn_var + BN_EPS)[None, :, None, None]
    y = y * bn_gamma[None, :, None, None] + bn_beta[None, :, None, None]
    pooled = jnp.mean(y, axis=(2, 3))                     # (N, D)
    logits = pooled @ lin_w.T + lin_b                     # (N, classes)
    return jax.nn.softmax(logits, axis=1)


if __name__ == "__main__":
    # Small shapes consistent with the module: cls(channel_input=4, classes=10, dim=32)
    N, C, H, W = 2, 4, 16, 16
    D, CLASSES = 32, 10

    key = jax.random.PRNGKey(0)
    kx, kc, kg, kb, km, kv, klw, klb = jax.random.split(key, 8)

    x = jax.random.normal(kx, (N, C, H, W), dtype=jnp.float32)

    # Deterministic synthetic parameters (shapes follow nn.Module __init__).
    conv_w = jax.random.normal(kc, (D, C, 1, 1), dtype=jnp.float32) * 0.1
    bn_gamma = 1.0 + 0.1 * jax.random.normal(kg, (D,), dtype=jnp.float32)
    bn_beta = 0.1 * jax.random.normal(kb, (D,), dtype=jnp.float32)
    bn_mean = 0.1 * jax.random.normal(km, (D,), dtype=jnp.float32)
    bn_var = 1.0 + 0.1 * jnp.abs(jax.random.normal(kv, (D,), dtype=jnp.float32))
    lin_w = jax.random.normal(klw, (CLASSES, D), dtype=jnp.float32) * 0.1
    lin_b = 0.1 * jax.random.normal(klb, (CLASSES,), dtype=jnp.float32)

    out = cls_forward(x, conv_w, bn_gamma, bn_beta, bn_mean, bn_var, lin_w, lin_b)
    out = jax.block_until_ready(out)

    ref = _reference(x, conv_w, bn_gamma, bn_beta, bn_mean, bn_var, lin_w, lin_b)
    assert out.shape == (N, CLASSES)
    assert jnp.allclose(out, ref, atol=1e-5, rtol=1e-5), (out, ref)
    assert jnp.allclose(jnp.sum(out, axis=1), 1.0, atol=1e-5)

    print("KERNEL_OK")
</pallas_src>

<mosaic_0001>
module attributes {stable_mosaic.version = 11 : i64} {
  func.func @_cls_kernel(%arg0: i32, %arg1: memref<2x4x256xf32, #tpu.memory_space<vmem>>, %arg2: memref<4x10xf32, #tpu.memory_space<vmem>>, %arg3: memref<1x10xf32, #tpu.memory_space<vmem>>, %arg4: memref<2x10xf32, #tpu.memory_space<vmem>>) attributes {dimension_semantics = [#tpu.dimension_semantics<parallel>], iteration_bounds = array<i64: 1>, scalar_prefetch = 0 : i64, scratch_operands = 0 : i64, tpu.core_type = #tpu.core_type<tc>, window_params = [{transform_indices = @transform_0, window_bounds = array<i64: 2, 4, 256>}, {pipeline_mode = #tpu.pipeline_mode<synchronous>, transform_indices = @transform_1, window_bounds = array<i64: 4, 10>}, {pipeline_mode = #tpu.pipeline_mode<synchronous>, transform_indices = @transform_2, window_bounds = array<i64: 1, 10>}, {transform_indices = @transform_3, window_bounds = array<i64: 2, 10>}]} {
    %c0 = arith.constant 0 : index
    %c0_0 = arith.constant 0 : index
    %c0_1 = arith.constant 0 : index
    %0 = vector.load %arg1[%c0, %c0_0, %c0_1] : memref<2x4x256xf32, #tpu.memory_space<vmem>>, vector<2x4x256xf32>
    %cst = arith.constant dense<0.000000e+00> : vector<2x4xf32>
    %1 = vector.multi_reduction <add>, %0, %cst [2] : vector<2x4x256xf32> to vector<2x4xf32>
    %cst_2 = arith.constant 2.560000e+02 : f32
    %2 = vector.broadcast %cst_2 : f32 to vector<2x4xf32>
    %3 = arith.divf %1, %2 : vector<2x4xf32>
    %c0_3 = arith.constant 0 : index
    %c0_4 = arith.constant 0 : index
    %4 = vector.load %arg2[%c0_3, %c0_4] : memref<4x10xf32, #tpu.memory_space<vmem>>, vector<4x10xf32>
    %cst_5 = arith.constant dense<0.000000e+00> : vector<2x10xf32>
    %5 = tpu.matmul %3, %4, %cst_5 {dimension_numbers = #tpu.dot_dimension_numbers<[1], [0], [0], [1], [0, 0, 1, 1], [], []>} : vector<2x4xf32>, vector<4x10xf32>, vector<2x10xf32> -> vector<2x10xf32>
    %c0_6 = arith.constant 0 : index
    %c0_7 = arith.constant 0 : index
    %6 = vector.load %arg3[%c0_6, %c0_7] : memref<1x10xf32, #tpu.memory_space<vmem>>, vector<1x10xf32>
    %7 = vector.broadcast %6 : vector<1x10xf32> to vector<2x10xf32>
    %8 = arith.addf %5, %7 : vector<2x10xf32>
    %cst_8 = arith.constant dense<0xFF800000> : vector<2xf32>
    %9 = vector.multi_reduction <maximumf>, %8, %cst_8 [1] : vector<2x10xf32> to vector<2xf32>
    %10 = vector.shape_cast %9 : vector<2xf32> to vector<2x1xf32>
    %11 = vector.broadcast %10 : vector<2x1xf32> to vector<2x10xf32>
    %12 = arith.subf %8, %11 : vector<2x10xf32>
    %13 = math.exp %12 : vector<2x10xf32>
    %cst_9 = arith.constant dense<0.000000e+00> : vector<2xf32>
    %14 = vector.multi_reduction <add>, %13, %cst_9 [1] : vector<2x10xf32> to vector<2xf32>
    %15 = vector.shape_cast %14 : vector<2xf32> to vector<2x1xf32>
    %16 = tpu.reciprocal %15 : vector<2x1xf32> -> vector<2x1xf32>
    %17 = vector.broadcast %16 : vector<2x1xf32> to vector<2x10xf32>
    %18 = arith.mulf %13, %17 : vector<2x10xf32>
    %c0_10 = arith.constant 0 : index
    %c0_11 = arith.constant 0 : index
    %19 = vector.load %arg4[%c0_10, %c0_11] : memref<2x10xf32, #tpu.memory_space<vmem>>, vector<2x10xf32>
    tpu.vector_store %arg4[%c0_10, %c0_11], %18 {strides = array<i32>} : memref<2x10xf32, #tpu.memory_space<vmem>>, vector<2x10xf32>,
    return
  }
  func.func @transform_0(%arg0: i32) -> (i32, i32, i32) {
    %c0_i32 = arith.constant 0 : i32
    %c0_i32_0 = arith.constant 0 : i32
    %c0_i32_1 = arith.constant 0 : i32
    return %arg0, %c0_i32, %c0_i32_0 : i32, i32, i32
  }
  func.func @transform_1(%arg0: i32) -> (i32, i32) {
    %c0_i32 = arith.constant 0 : i32
    %c0_i32_0 = arith.constant 0 : i32
    %c0_i32_1 = arith.constant 0 : i32
    return %c0_i32, %c0_i32_0 : i32, i32
  }
  func.func @transform_2(%arg0: i32) -> (i32, i32) {
    %c0_i32 = arith.constant 0 : i32
    %c0_i32_0 = arith.constant 0 : i32
    %c0_i32_1 = arith.constant 0 : i32
    return %c0_i32, %c0_i32_0 : i32, i32
  }
  func.func @transform_3(%arg0: i32) -> (i32, i32) {
    %c0_i32 = arith.constant 0 : i32
    %c0_i32_0 = arith.constant 0 : i32
    return %arg0, %c0_i32 : i32, i32
  }
}

</mosaic_0001>

<llo_original>
// kernel: cls_forward.1
$region0: #{cls_forward.1}
  #allocation0 [shape = 'u32[]', space=smem, size = 0x4, offset = 0x4, fixed_abs, tag = 'smem constant byte address 0x4 - core index']
  #allocation1 [shape = 'u32[144,128]{1,0:T(1,128)}', space=vmem, size = 0x12000, scoped, tag = 'internal scratch']
  %s0 = inlined_call_operand.vmem [shape: f32[2,4,256], index: 0, kind: input, shape index: {}]
  %s1 = inlined_call_operand.vmem [shape: f32[4,10], index: 1, kind: input, shape index: {}]
  %s2 = inlined_call_operand.vmem [shape: f32[1,10], index: 2, kind: input, shape index: {}]
  %s3 = inlined_call_operand.hbm [shape: f32[2,10], index: 3, kind: output, shape index: {}]
  %s4 = sld [smem:[#allocation0]]
  $region22: #{cls_forward.1} parent=0
    _
  %s6 = ssub.s32 1, %s4
  %s7 = scalar_select 0, %s6, %s4
  $region1: #{cls_forward.1} parent=0
    #allocation2 [shape = 'u8[1024]{0}', space=vmem, size = 0x400, scoped, tag = 'output window, operand 0, single buffered']
    #allocation3 [shape = 's32[1]{0}', space=sflag, size = 0x4, scoped, tag = 'scoped memory for cls_forward.1']
    %8 = vsyncpa [#allocation3], 0
    // Predicated region
    $region2: #{cls_forward.1} parent=1 // pred_check
      _
    $region3: #{cls_forward.1} parent=1 // pred_check_branch
      %10 = sbr.rel (0) target = $region5
    $region4: #{cls_forward.1} parent=1 // pred_region
      _
    $region5: #{cls_forward.1} parent=1 // pred_fallthru
      _
    // Predicated region
    $region6: #{cls_forward.1} parent=1 // pred_check
      _
    $region7: #{cls_forward.1} parent=1 // pred_check_branch
      %12 = sbr.rel (0) target = $region9
    $region8: #{cls_forward.1} parent=1 // pred_region
      _
    $region9: #{cls_forward.1} parent=1 // pred_fallthru
      _
    // Predicated region
    $region10: #{cls_forward.1} parent=1 // pred_check
      _
    $region11: #{cls_forward.1} parent=1 // pred_check_branch
      %14 = sbr.rel (0) target = $region13
    $region12: #{cls_forward.1} parent=1 // pred_region
      _
    $region13: #{cls_forward.1} parent=1 // pred_fallthru
      _
    %v15 = vld [vmem:[%s0] sm:$0xff]
    %v16 = vld [vmem:[%s0 + $0x8] sm:$0xff]
    %v19 = vcombine.high %v15, %v15
    %v20 = vcombine.high %v16, %v16
    %vm23 = vcmask 1043456
    %v24 = vsel %vm23, %v15, 0.0
    %v25 = vsel %vm23, %v19, 0.0
    %v26 = vadd.f32 %v24, %v25
    %27 = vadd.xlane.f32.xlu0 %v26
    %v28 = vpop.xlane.xlu0 %27
    %v29 = vsel %vm23, %v16, 0.0
    %v30 = vsel %vm23, %v20, 0.0
    %v31 = vadd.f32 %v29, %v30
    %32 = vadd.xlane.f32.xlu0 %v31
    %v33 = vpop.xlane.xlu0 %32
    %v34 = vrcp.pop 256.0
    %v35 = vmul.f32 %v28, %v34
    %v36 = vmul.f32 %v33, %v34
    %v37 = vld [vmem:[%s1] sm:$0xf]
    %v38 = vld [vmem:[%s2] sm:$0x1]
    %v40 = vlaneseq
    %v41 = vshrl.u32 %v40, 7
    %v42 = vsub.s32 0, %v41
    %v43 = vrot.slane %v38, %v42
    %v47 = vlaneseq
    %v48 = vand.u32 %v47, 127
    %v49 = vlaneseq
    %v50 = vshrl.u32 %v49, 7
    %v51 = vsub.s32 %v48, %v50
    %v52 = vrot.slane %v35, %v51
    %v53 = vlaneseq
    %v54 = vshrl.u32 %v53, 7
    %v55 = vsub.s32 %v48, %v54
    %v56 = vrot.slane %v36, %v55
    %vm57 = vcmask 1041409
    %v58 = vsel %vm57, %v56, %v52
    %vm59 = vcmask 31744
    %v60 = vsel %vm59, %v58, 0
    %v63 = vsel %vm23, %v37, 0
    %65 = vmatprep.subr.mxu0 0.0
    %66 = vmatpush1.msra.mxu0 %v63
    %67 = vmatprep.subr.mxu0 0.0
    %68 = vmatpush1.msra.mxu0 0.0
    %69 = vmatprep.subr.mxu0 0.0
    %70 = vmatpush1.msra.mxu0 0.0
    %71 = vmatprep.subr.mxu0 0.0
    %72 = vmatpush1.msra.mxu0 0.0
    %73 = vmatprep.subr.mxu0 0.0
    %74 = vmatpush1.msra.mxu0 0.0
    %75 = vmatprep.subr.mxu0 0.0
    %76 = vmatpush1.msra.mxu0 0.0
    %77 = vmatprep.subr.mxu0 0.0
    %78 = vmatpush1.msra.mxu0 0.0
    %79 = vmatprep.subr.mxu0 0.0
    %80 = vmatpush1.msra.mxu0 0.0
    %81 = vmatprep.subr.mxu0 0.0
    %82 = vmatpush1.msra.mxu0 0.0
    %83 = vmatprep.subr.mxu0 0.0
    %84 = vmatpush1.msra.mxu0 0.0
    %85 = vmatprep.subr.mxu0 0.0
    %86 = vmatpush1.msra.mxu0 0.0
    %87 = vmatprep.subr.mxu0 0.0
    %88 = vmatpush1.msra.mxu0 0.0
    %89 = vmatprep.subr.mxu0 0.0
    %90 = vmatpush1.msra.mxu0 0.0
    %91 = vmatprep.subr.mxu0 0.0
    %92 = vmatpush1.msra.mxu0 0.0
    %93 = vmatprep.subr.mxu0 0.0
    %94 = vmatpush1.msra.mxu0 0.0
    %95 = vmatprep.subr.mxu0 0.0
    %96 = vmatpush1.msra.mxu0 0.0
    %97 = vmatprep.subr.mxu0 0.0
    %98 = vmatpush1.msra.mxu0 0.0
    %99 = vmatprep.subr.mxu0 0.0
    %100 = vmatpush1.msra.mxu0 0.0
    %101 = vmatprep.subr.mxu0 0.0
    %102 = vmatpush1.msra.mxu0 0.0
    %103 = vmatprep.subr.mxu0 0.0
    %104 = vmatpush1.msra.mxu0 0.0
    %105 = vmatprep.subr.mxu0 0.0
    %106 = vmatpush1.msra.mxu0 0.0
    %107 = vmatprep.subr.mxu0 0.0
    %108 = vmatpush1.msra.mxu0 0.0
    %109 = vmatprep.subr.mxu0 0.0
    %110 = vmatpush1.msra.mxu0 0.0
    %111 = vmatprep.subr.mxu0 0.0
    %112 = vmatpush1.msra.mxu0 0.0
    %113 = vmatprep.subr.mxu0 0.0
    %114 = vmatpush1.msra.mxu0 0.0
    %115 = vmatprep.subr.mxu0 0.0
    %116 = vmatpush1.msra.mxu0 0.0
    %117 = vmatprep.subr.mxu0 0.0
    %118 = vmatpush1.msra.mxu0 0.0
    %119 = vmatprep.subr.mxu0 0.0
    %120 = vmatpush1.msra.mxu0 0.0
    %121 = vmatprep.subr.mxu0 0.0
    %122 = vmatpush1.msra.mxu0 0.0
    %123 = vmatprep.subr.mxu0 0.0
    %124 = vmatpush1.msra.mxu0 0.0
    %125 = vmatprep.subr.mxu0 0.0
    %126 = vmatpush1.msra.mxu0 0.0
    %127 = vmatprep.subr.mxu0 0.0
    %128 = vmatpush1.msra.mxu0 0.0
    %129 = vmatprep.mubr.f32.mxu0 0.0
    %130 = vmatmul.mubr.f32.gmra.mrb[0].mxu0 %v60
    %v131 = vpop.f32.mrb[0].mxu0
    %v132 = vadd.f32 %v43, %v131
    %v133 = vpop.f32.mrb[0].mxu0
    %134 = vdwg.mxu0
    %vm135 = vcmask 74752
    %v136 = vsel %vm135, %v132, -inf
    %137 = vmax.xlane.f32.xlu0 %v136
    %v138 = vpop.xlane.xlu0 %137
    %v139 = vsub.f32 %v132, %v138
    %v140 = vmul.f32 %v139, 1.442695
    %v141 = vpow.pop %v140
    %v142 = vsel %vm135, %v141, 0.0
    %143 = vadd.xlane.f32.xlu0 %v142
    %v144 = vpop.xlane.xlu0 %143
    %v145 = vrcp.pop %v144
    %v146 = vmul.f32 %v141, %v145
    %147 = vst.msk [vmem:[#allocation2] sm:$0x3] %vm135, %v146
    // Predicated region
    $region14: #{cls_forward.1} parent=1 // pred_check
      _
    $region15: #{cls_forward.1} parent=1 // pred_check_branch
      %149 = sbr.rel (0) target = $region17
    $region16: #{cls_forward.1} parent=1 // pred_region
      %s151 = ssub.s32 32, 32
      %152 = vsyncadd [#allocation3], %s151
      %s154 = sshll.u32 [#allocation2], 4
      %s155 = int_to_ptr.vmem [resolvable:$true] %s154
      %157 = dma.vmem_to_hbm [thread:$0]  %s155, 32, %s3, [#allocation3]
    $region17: #{cls_forward.1} parent=1 // pred_fallthru
      _
    // Predicated region
    $region18: #{cls_forward.1} parent=1 // pred_check
      _
    $region19: #{cls_forward.1} parent=1 // pred_check_branch
      %159 = sbr.rel (0) target = $region21
    $region20: #{cls_forward.1} parent=1 // pred_region
      %160 = dma.done [#allocation3], 32
    $region21: #{cls_forward.1} parent=1 // pred_fallthru
      _
    %161 = vsyncpa [#allocation3], 1

</llo_original>
